<compile_context>
chip_gen: v7x
topology: tpu7x:2x2x1
jax: 0.10.0
libtpu: 0.0.40
codegen_flags: <defaults>
</compile_context>

<pallas_src>
import functools

import jax
import jax.numpy as jnp
from jax.experimental import pallas as pl
from jax.experimental.pallas import tpu as pltpu


# ---------------------------------------------------------------------------
# Kernel body
# ---------------------------------------------------------------------------
def _rmsnorm_kernel(x_ref, w_ref, o_ref, *, eps: float, inv_dim: float,
                    roundtrip_input_dtype: bool):
    # x_ref: (tile_rows, D) in x.dtype ; w_ref: (1, D) float32
    # o_ref: (tile_rows, D) in out dtype.
    x32 = x_ref[...].astype(jnp.float32)
    # sum * (1/D) instead of mean: constant multiply, no divide.
    ss = jnp.sum(x32 * x32, axis=-1, keepdims=True)          # XLU reduction
    norm = x32 * jax.lax.rsqrt(ss * inv_dim + eps)            # EUP rsqrt
    if roundtrip_input_dtype:
        # torch: self._norm(x.float()).type_as(x) * self.weight  (weight stays f32)
        norm = norm.astype(x_ref.dtype).astype(jnp.float32)
    # Weight multiply in f32 (exact torch semantics, no bf16 VPU pack/unpack);
    # cast only the final product at the store.
    o_ref[...] = (norm * w_ref[...]).astype(o_ref.dtype)


# ---------------------------------------------------------------------------
# Host-side tiling helpers
# ---------------------------------------------------------------------------
def _round_up(v: int, m: int) -> int:
    return ((v + m - 1) // m) * m


def _round_down(v: int, m: int) -> int:
    return max(m, (v // m) * m)


def _device_kind() -> str:
    try:
        return jax.devices()[0].device_kind.lower()
    except Exception:
        return ""


def _vmem_capacity_bytes() -> int:
    # Generation-aware VMEM (v4/v5e/v5p/v6e: 128 MiB, v7x: 64 MiB).
    try:
        info = pltpu.get_tpu_info()
        cap = getattr(info, "vmem_capacity_bytes", None)
        if cap:
            return int(cap)
    except Exception:
        pass
    kind = _device_kind()
    if "v7" in kind or "7x" in kind:
        return 64 * 1024 * 1024
    return 128 * 1024 * 1024


def _num_tensorcores() -> int:
    # 2 TensorCores per chip on v4/v5p (megacore) and v7x; 1 on v5e/v6e.
    kind = _device_kind()
    if any(tag in kind for tag in ("v7", "7x", "v4", "v5p")):
        return 2
    return 1


def _pick_tile_rows(rows: int, dim: int, in_itemsize: int, out_itemsize: int,
                    vmem_bytes: int) -> int:
    # Sublane packing of the input dtype: 8 f32 / 16 bf16 / 32 int8-fp8.
    sublane = max(8, 32 // max(in_itemsize, 1))

    # Per-element VMEM footprint: 2 double-buffered input + output blocks and
    # ~4 f32 temporaries (x32 / x*x / norm / product) — conservative so that
    # v7x's 64 MiB is never overflowed.
    per_elem = 2 * in_itemsize + 2 * out_itemsize + 4 * 4
    budget = (vmem_bytes * 2) // 5                      # ~40% of VMEM for blocks
    tile = budget // max(dim * per_elem, 1)

    # Bytes-based cap on the raw input block (replaces the old fixed row cap):
    # amortizes the ~0.35 us/step overhead at small D, avoids waste at big D.
    in_cap_bytes = 16 * 1024 * 1024
    tile = min(tile, in_cap_bytes // max(dim * in_itemsize, 1))

    tile = max(tile, sublane)
    tile = min(tile, _round_up(rows, sublane))          # never bigger than the data

    # Keep >= 2 pipelined grid steps per TensorCore when there is enough work:
    # v7x (2 TCs) -> >= 4 total steps; v5e/v6e -> >= 2 for DMA/compute overlap.
    min_steps = 2 * _num_tensorcores()
    if rows > min_steps * sublane:
        tile = min(tile, _round_up(pl.cdiv(rows, min_steps), sublane))

    return _round_down(int(tile), sublane)


# ---------------------------------------------------------------------------
# Public wrapper
# ---------------------------------------------------------------------------
def rmsnorm(x: jax.Array, weight: jax.Array, eps: float = 1e-6,
            *, tile_rows: int | None = None, out_dtype=None) -> jax.Array:
    """RMSNorm over the last axis of x; weight has shape (dim,).

    out_dtype=None follows torch promotion (f32 output for bf16 x). Pass
    jnp.bfloat16 to emit bf16 directly (6 -> 4 bytes/element of HBM traffic)
    when the consumer allows deviating from torch's promotion.
    """
    orig_shape = x.shape
    dim = orig_shape[-1]
    assert weight.shape == (dim,), f"weight shape {weight.shape} != ({dim},)"

    rows = 1
    for s in orig_shape[:-1]:
        rows *= s
    x2d = x.reshape(rows, dim)
    w2d = weight.reshape(1, dim).astype(jnp.float32)

    if out_dtype is None:
        out_dtype = jnp.promote_types(x.dtype, jnp.float32)
    out_dtype = jnp.dtype(out_dtype)

    in_itemsize = jnp.dtype(x.dtype).itemsize
    out_itemsize = out_dtype.itemsize
    sublane = max(8, 32 // max(in_itemsize, 1))
    vmem_bytes = _vmem_capacity_bytes()

    if tile_rows is None:
        tile_rows = _pick_tile_rows(rows, dim, in_itemsize, out_itemsize,
                                    vmem_bytes)
    else:
        # Keep user-supplied tiles sublane-aligned so stores stay dense.
        tile_rows = min(_round_up(max(1, int(tile_rows)), sublane),
                        _round_up(rows, sublane))

    # Ragged last block is masked by Pallas; no host-side pad/concat/slice.
    grid = (pl.cdiv(rows, tile_rows),)

    # Footprint-derived VMEM limit (block bytes + generous slack), capped at
    # the generation's physical capacity.
    per_elem = 2 * in_itemsize + 2 * out_itemsize + 4 * 4
    footprint = tile_rows * dim * per_elem + 2 * dim * 4
    vmem_limit = int(min(vmem_bytes, max(footprint + (16 << 20), 32 << 20)))

    kernel = functools.partial(
        _rmsnorm_kernel,
        eps=float(eps),
        inv_dim=1.0 / float(dim),
        roundtrip_input_dtype=(jnp.dtype(x.dtype) != jnp.dtype(jnp.float32)),
    )

    out = pl.pallas_call(
        kernel,
        out_shape=jax.ShapeDtypeStruct((rows, dim), out_dtype),
        grid_spec=pltpu.PrefetchScalarGridSpec(
            num_scalar_prefetch=0,
            grid=grid,
            in_specs=[
                pl.BlockSpec((tile_rows, dim), lambda i: (i, 0)),
                # Constant (1, D) f32 weight row, same block every step.
                pl.BlockSpec((1, dim), lambda i: (0, 0)),
            ],
            out_specs=pl.BlockSpec((tile_rows, dim), lambda i: (i, 0)),
        ),
        compiler_params=pltpu.CompilerParams(
            dimension_semantics=("parallel",),
            vmem_limit_bytes=vmem_limit,
        ),
    )(x2d, w2d)

    return out.reshape(orig_shape)


# ---------------------------------------------------------------------------
# Self-test
# ---------------------------------------------------------------------------
if __name__ == "__main__":
    eps = 1e-6
    key = jax.random.PRNGKey(0)
    kx, kw, k2, k3 = jax.random.split(key, 4)

    def ref_rmsnorm(x, w, eps, out_dtype=None):
        # Mirrors the torch forward exactly (incl. the type_as round-trip).
        x32 = x.astype(jnp.float32)
        ms = jnp.sum(x32 * x32, axis=-1, keepdims=True) * (1.0 / x.shape[-1])
        norm = x32 * jax.lax.rsqrt(ms + eps)
        norm = norm.astype(x.dtype).astype(jnp.float32)
        out = norm * w.astype(jnp.float32)
        if out_dtype is None:
            out_dtype = jnp.promote_types(x.dtype, jnp.float32)
        return out.astype(out_dtype)

    batch, seq, hidden = 2, 8, 128
    w = 0.5 + jax.random.uniform(kw, (hidden,), jnp.float32)

    # 1) bf16 input, torch-promoted f32 output (the module's mixed-dtype path).
    x = jax.random.normal(kx, (batch, seq, hidden), jnp.float32).astype(jnp.bfloat16)
    out = jax.block_until_ready(rmsnorm(x, w, eps=eps))
    ref = ref_rmsnorm(x, w, eps)
    assert out.shape == ref.shape and out.dtype == ref.dtype
    assert jnp.allclose(out, ref, atol=1e-2, rtol=1e-2)

    # 2) f32 input, ragged row count; auto tile and a forced-small tile so the
    #    grid has multiple steps with a masked last block.
    x2 = jax.random.normal(k2, (3, 5, hidden), jnp.float32)
    ref2 = ref_rmsnorm(x2, w, eps)
    for tr in (None, 8):
        out2 = jax.block_until_ready(rmsnorm(x2, w, eps=eps, tile_rows=tr))
        assert out2.shape == ref2.shape and out2.dtype == ref2.dtype
        assert jnp.allclose(out2, ref2, atol=1e-4, rtol=1e-4)

    # 3) bf16 input with the bf16-output knob (HBM saver); multiply stays f32,
    #    only the final product is cast.
    x3 = jax.random.normal(k3, (batch, seq, hidden), jnp.float32).astype(jnp.bfloat16)
    out3 = jax.block_until_ready(rmsnorm(x3, w, eps=eps, out_dtype=jnp.bfloat16))
    ref3 = ref_rmsnorm(x3, w, eps, out_dtype=jnp.bfloat16)
    assert out3.shape == ref3.shape and out3.dtype == jnp.dtype(jnp.bfloat16)
    assert jnp.allclose(out3.astype(jnp.float32), ref3.astype(jnp.float32),
                        atol=2e-2, rtol=2e-2)

    print("KERNEL_OK")
</pallas_src>

<mosaic_0001>
module attributes {stable_mosaic.version = 11 : i64} {
  func.func @_rmsnorm_kernel(%arg0: i32, %arg1: memref<16x128xbf16, #tpu.memory_space<vmem>>, %arg2: memref<1x128xf32, #tpu.memory_space<vmem>>, %arg3: memref<16x128xf32, #tpu.memory_space<vmem>>) attributes {dimension_semantics = [#tpu.dimension_semantics<parallel>], iteration_bounds = array<i64: 1>, scalar_prefetch = 0 : i64, scratch_operands = 0 : i64, tpu.core_type = #tpu.core_type<tc>, window_params = [{transform_indices = @transform_0, window_bounds = array<i64: 16, 128>}, {pipeline_mode = #tpu.pipeline_mode<synchronous>, transform_indices = @transform_1, window_bounds = array<i64: 1, 128>}, {transform_indices = @transform_2, window_bounds = array<i64: 16, 128>}]} {
    %c0 = arith.constant 0 : index
    %c0_0 = arith.constant 0 : index
    %0 = vector.load %arg1[%c0, %c0_0] : memref<16x128xbf16, #tpu.memory_space<vmem>>, vector<16x128xbf16>
    %1 = arith.extf %0 : vector<16x128xbf16> to vector<16x128xf32>
    %2 = arith.mulf %1, %1 : vector<16x128xf32>
    %cst = arith.constant dense<0.000000e+00> : vector<16xf32>
    %3 = vector.multi_reduction <add>, %2, %cst [1] : vector<16x128xf32> to vector<16xf32>
    %4 = vector.shape_cast %3 : vector<16xf32> to vector<16x1xf32>
    %cst_1 = arith.constant 7.812500e-03 : f32
    %5 = vector.broadcast %cst_1 : f32 to vector<16x1xf32>
    %6 = arith.mulf %4, %5 : vector<16x1xf32>
    %cst_2 = arith.constant 9.99999997E-7 : f32
    %7 = vector.broadcast %cst_2 : f32 to vector<16x1xf32>
    %8 = arith.addf %6, %7 : vector<16x1xf32>
    %9 = math.rsqrt %8 : vector<16x1xf32>
    %10 = vector.broadcast %9 : vector<16x1xf32> to vector<16x128xf32>
    %11 = arith.mulf %1, %10 : vector<16x128xf32>
    %12 = arith.truncf %11 : vector<16x128xf32> to vector<16x128xbf16>
    %13 = arith.extf %12 : vector<16x128xbf16> to vector<16x128xf32>
    %c0_3 = arith.constant 0 : index
    %c0_4 = arith.constant 0 : index
    %14 = vector.load %arg2[%c0_3, %c0_4] : memref<1x128xf32, #tpu.memory_space<vmem>>, vector<1x128xf32>
    %15 = vector.broadcast %14 : vector<1x128xf32> to vector<16x128xf32>
    %16 = arith.mulf %13, %15 : vector<16x128xf32>
    %c0_5 = arith.constant 0 : index
    %c0_6 = arith.constant 0 : index
    %17 = vector.load %arg3[%c0_5, %c0_6] : memref<16x128xf32, #tpu.memory_space<vmem>>, vector<16x128xf32>
    tpu.vector_store %arg3[%c0_5, %c0_6], %16 {strides = array<i32>} : memref<16x128xf32, #tpu.memory_space<vmem>>, vector<16x128xf32>,
    return
  }
  func.func @transform_0(%arg0: i32) -> (i32, i32) {
    %c0_i32 = arith.constant 0 : i32
    %c0_i32_0 = arith.constant 0 : i32
    return %arg0, %c0_i32 : i32, i32
  }
  func.func @transform_1(%arg0: i32) -> (i32, i32) {
    %c0_i32 = arith.constant 0 : i32
    %c0_i32_0 = arith.constant 0 : i32
    %c0_i32_1 = arith.constant 0 : i32
    return %c0_i32, %c0_i32_0 : i32, i32
  }
  func.func @transform_2(%arg0: i32) -> (i32, i32) {
    %c0_i32 = arith.constant 0 : i32
    %c0_i32_0 = arith.constant 0 : i32
    return %arg0, %c0_i32 : i32, i32
  }
}

</mosaic_0001>

<llo_original>
// kernel: tpu_custom_call.1
$region0: #{tpu_custom_call.1}
  #allocation0 [shape = 'u32[]', space=smem, size = 0x4, offset = 0x4, fixed_abs, tag = 'smem constant byte address 0x4 - core index']
  #allocation1 [shape = 'u32[144,128]{1,0:T(1,128)}', space=vmem, size = 0x12000, scoped, tag = 'internal scratch']
  %s0 = inlined_call_operand.hbm [shape: bf16[16,128], index: 0, kind: input, shape index: {}]
  %s1 = inlined_call_operand.vmem [shape: f32[1,128], index: 1, kind: input, shape index: {}]
  %s2 = inlined_call_operand.hbm [shape: f32[16,128], index: 2, kind: output, shape index: {}]
  %s3 = sld [smem:[#allocation0]]
  $region22: #{tpu_custom_call.1} parent=0
    _
  %s5 = ssub.s32 1, %s3
  %s6 = scalar_select 0, %s5, %s3
  $region1: #{tpu_custom_call.1} parent=0
    #allocation2 [shape = 'u8[4096]{0}', space=vmem, size = 0x1000, scoped, tag = 'input window, operand 0, single buffered']
    #allocation3 [shape = 's32[1]{0}', space=sflag, size = 0x4, scoped, tag = 'scoped memory for tpu_custom_call.1']
    #allocation4 [shape = 's32[1]{0}', space=sflag, size = 0x4, scoped, tag = 'scoped memory for tpu_custom_call.1']
    #allocation5 [shape = 'u8[8192]{0}', space=vmem, size = 0x2000, scoped, tag = 'output window, operand 0, single buffered']
    %7 = vsyncpa [#allocation3], 0
    %8 = vsyncpa [#allocation4], 0
    // Predicated region
    $region2: #{tpu_custom_call.1} parent=1 // pred_check
      _
    $region3: #{tpu_custom_call.1} parent=1 // pred_check_branch
      %10 = sbr.rel (0) target = $region5
    $region4: #{tpu_custom_call.1} parent=1 // pred_region
      %s12 = ssub.s32 128, 128
      %13 = vsyncadd [#allocation3], %s12
      %s14 = sshll.u32 [#allocation2], 4
      %s15 = int_to_ptr.vmem [resolvable:$true] %s14
      %20 = dma.hbm_to_vmem [thread:$0]  %s0, 128, %s15, [#allocation3], 64, 64, 4
    $region5: #{tpu_custom_call.1} parent=1 // pred_fallthru
      _
    // Predicated region
    $region6: #{tpu_custom_call.1} parent=1 // pred_check
      _
    $region7: #{tpu_custom_call.1} parent=1 // pred_check_branch
      %22 = sbr.rel (0) target = $region9
    $region8: #{tpu_custom_call.1} parent=1 // pred_region
      _
    $region9: #{tpu_custom_call.1} parent=1 // pred_fallthru
      _
    // Predicated region
    $region10: #{tpu_custom_call.1} parent=1 // pred_check
      _
    $region11: #{tpu_custom_call.1} parent=1 // pred_check_branch
      %24 = sbr.rel (0) target = $region13
    $region12: #{tpu_custom_call.1} parent=1 // pred_region
      %25 = dma.done [#allocation3], 128
    $region13: #{tpu_custom_call.1} parent=1 // pred_fallthru
      _
    %v26 = vld [vmem:[#allocation2] sm:$0xf]
    %v27 = vld [vmem:[#allocation2 + $0x4] sm:$0xf]
    %v28 = vunpack.c.l.bf16 %v26
    %v29 = vunpack.c.l.bf16 %v27
    %v30 = vmul.f32 %v28, %v28
    %v31 = vmul.f32 %v29, %v29
    %32 = vadd.xlane.f32.xlu0 %v30
    %v33 = vpop.xlane.xlu0 %32
    %34 = vadd.xlane.f32.xlu0 %v31
    %v35 = vpop.xlane.xlu0 %34
    %v36 = vmul.f32 %v33, 0.0078125
    %v37 = vmul.f32 %v35, 0.0078125
    %v38 = vadd.f32 %v36, 1e-06
    %v39 = vadd.f32 %v37, 1e-06
    %v40 = vrsqrt.pop %v38
    %v41 = vrsqrt.pop %v39
    %v42 = vmul.f32 %v28, %v40
    %v43 = vmul.f32 %v29, %v41
    %v44 = vpack.c.bf16 %v43, %v42
    %v45 = vunpack.c.l.bf16 %v44
    %v46 = vunpack.c.h.bf16 %v44
    %v47 = vld [vmem:[%s1] sm:$0x1]
    %v49 = vlaneseq
    %v50 = vshrl.u32 %v49, 7
    %v51 = vsub.s32 0, %v50
    %v52 = vrot.slane %v47, %v51
    %v54 = vmul.f32 %v45, %v52
    %v55 = vmul.f32 %v46, %v52
    %56 = vst [vmem:[#allocation5] sm:$0xff] %v54
    %57 = vst [vmem:[#allocation5 + $0x8] sm:$0xff] %v55
    // Predicated region
    $region14: #{tpu_custom_call.1} parent=1 // pred_check
      _
    $region15: #{tpu_custom_call.1} parent=1 // pred_check_branch
      %59 = sbr.rel (0) target = $region17
    $region16: #{tpu_custom_call.1} parent=1 // pred_region
      %s61 = ssub.s32 256, 256
      %62 = vsyncadd [#allocation4], %s61
      %s63 = sshll.u32 [#allocation5], 4
      %s64 = int_to_ptr.vmem [resolvable:$true] %s63
      %69 = dma.vmem_to_hbm [thread:$0]  %s64, 256, %s2, [#allocation4], 128, 128, 8
    $region17: #{tpu_custom_call.1} parent=1 // pred_fallthru
      _
    // Predicated region
    $region18: #{tpu_custom_call.1} parent=1 // pred_check
      _
    $region19: #{tpu_custom_call.1} parent=1 // pred_check_branch
      %71 = sbr.rel (0) target = $region21
    $region20: #{tpu_custom_call.1} parent=1 // pred_region
      %72 = dma.done [#allocation4], 256
    $region21: #{tpu_custom_call.1} parent=1 // pred_fallthru
      _
    %73 = vsyncpa [#allocation3], 1
    %74 = vsyncpa [#allocation4], 1

</llo_original>
